<compile_context>
chip_gen: v6e
topology: v6e:2x2x1
jax: 0.10.0
libtpu: 0.0.40
codegen_flags: <defaults>
</compile_context>

<pallas_src>
import jax
import jax.numpy as jnp
from jax.experimental import pallas as pl
from jax.experimental.pallas import tpu as pltpu


def _round_up(x, m):
    return ((x + m - 1) // m) * m


def _pad_and_tile(dim, target, align):
    """Pad `dim` and pick a tile: full (aligned) extent when small, otherwise
    pad to a multiple of `target` and tile at `target`. Returns (padded, tile)."""
    padded = _round_up(dim, align)
    if padded <= target:
        return padded, padded
    padded = _round_up(dim, target)
    return padded, target


def _complex_linear_kernel(x_ref, w_ref, bm_ref, bp_ref, or_ref, oi_ref, acc_ref):
    k = pl.program_id(2)
    tm, tn = or_ref.shape
    tk = x_ref.shape[2]

    @pl.when(k == 0)
    def _():
        acc_ref[...] = jnp.zeros_like(acc_ref)

    # (2, tm, tk) -> (2*tm, tk): row-major flatten of the leading axis. This is
    # layout-free on TPU because tm is a multiple of 8 (sublane tile).
    x = x_ref[...].reshape(2 * tm, tk)

    # Single MXU issue per K step: the weight block is [W_r^T_j | W_i^T_j].
    acc_ref[...] += jnp.dot(x, w_ref[...], preferred_element_type=jnp.float32)

    @pl.when(k == pl.num_programs(2) - 1)
    def _():
        acc = acc_ref[...]
        rr = acc[:tm, :tn]      # x_r @ W_r^T
        ri = acc[:tm, tn:]      # x_r @ W_i^T
        ir = acc[tm:, :tn]      # x_i @ W_r^T
        ii = acc[tm:, tn:]      # x_i @ W_i^T
        or_ref[...] = (rr - ii + bm_ref[...]).astype(or_ref.dtype)   # + (b_r - b_i)
        oi_ref[...] = (ir + ri + bp_ref[...]).astype(oi_ref.dtype)   # + (b_r + b_i)


def prepare_complex_linear_params(w_r, w_i, b_r, b_i, *,
                                  tn_target=512, tk_target=512, use_bf16=False):
    """One-time parameter prep (module __init__), NOT per forward call.

    w_r, w_i: (out_features, in_features)  -- PyTorch nn.Linear layout.
    b_r, b_i: (out_features,)
    Builds a padded, block-interleaved [W_r^T | W_i^T] weight and the combined
    bias rows. With use_bf16=True the weight is cast to bf16 in HBM here
    (numerics differ from strict fp32; accumulation stays f32).
    """
    out_f, in_f = w_r.shape
    out_pad, tn = _pad_and_tile(out_f, tn_target, 128)
    in_pad, tk = _pad_and_tile(in_f, tk_target, 128)
    n_blocks = out_pad // tn

    def pad_w(w):
        w = jnp.asarray(w, jnp.float32)
        return jnp.pad(w, ((0, out_pad - out_f), (0, in_pad - in_f)))

    wr_t = pad_w(w_r).T                      # (in_pad, out_pad)
    wi_t = pad_w(w_i).T
    # Block-interleave along the out axis so output tile j sees [W_r_j | W_i_j]
    # as one contiguous (tk, 2*tn) block.
    w_cat = jnp.concatenate(
        [wr_t.reshape(in_pad, n_blocks, tn), wi_t.reshape(in_pad, n_blocks, tn)],
        axis=2).reshape(in_pad, 2 * out_pad)
    if use_bf16:
        w_cat = w_cat.astype(jnp.bfloat16)   # cast once in HBM, not per K step

    def pad_b(b):
        b = jnp.asarray(b, jnp.float32)
        return jnp.pad(b, (0, out_pad - out_f))

    b_minus = (pad_b(b_r) - pad_b(b_i)).reshape(1, out_pad)
    b_plus = (pad_b(b_r) + pad_b(b_i)).reshape(1, out_pad)

    return dict(w_cat=w_cat, b_minus=b_minus, b_plus=b_plus,
                out_f=out_f, in_f=in_f, out_pad=out_pad, in_pad=in_pad,
                tn=tn, tk=tk, use_bf16=use_bf16)


def complex_linear(params, x_r, x_i, *, tm_target=512):
    """x_r/x_i: (B, in_features). Returns (out_r, out_i), each (B, out_features)."""
    out_f, in_f = params["out_f"], params["in_f"]
    out_pad, in_pad = params["out_pad"], params["in_pad"]
    tn, tk = params["tn"], params["tk"]

    B, in_actual = x_r.shape
    assert in_actual == in_f and x_i.shape == x_r.shape

    m_pad, tm = _pad_and_tile(B, tm_target, 8)   # tm -> B streams weights once

    act_dtype = jnp.bfloat16 if params["use_bf16"] else x_r.dtype

    def pad_x(x):
        return jnp.pad(jnp.asarray(x),
                       ((0, m_pad - B), (0, in_pad - in_f))).astype(act_dtype)

    # Stack once in HBM (removes the per-K-step in-kernel concat copy).
    x_stacked = jnp.stack([pad_x(x_r), pad_x(x_i)], axis=0)   # (2, m_pad, in_pad)

    grid = (m_pad // tm, out_pad // tn, in_pad // tk)          # reduction K innermost
    assert m_pad % tm == 0 and out_pad % tn == 0 and in_pad % tk == 0
    # TODO(synk): when grid[0] == grid[1] == 1 (tiny batch & out_f), one of
    # v7x's two TensorCores idles; a prep-time tn split would recover it.

    out_shape = (jax.ShapeDtypeStruct((m_pad, out_pad), x_r.dtype),
                 jax.ShapeDtypeStruct((m_pad, out_pad), x_r.dtype))

    out_r_p, out_i_p = pl.pallas_call(
        _complex_linear_kernel,
        out_shape=out_shape,
        grid_spec=pltpu.PrefetchScalarGridSpec(
            num_scalar_prefetch=0,
            grid=grid,
            in_specs=[
                pl.BlockSpec((2, tm, tk), lambda i, j, k: (0, i, k)),   # [x_r ; x_i]
                pl.BlockSpec((tk, 2 * tn), lambda i, j, k: (k, j)),     # [W_r^T | W_i^T]_j
                pl.BlockSpec((1, tn), lambda i, j, k: (0, j)),          # b_r - b_i
                pl.BlockSpec((1, tn), lambda i, j, k: (0, j)),          # b_r + b_i
            ],
            out_specs=(
                pl.BlockSpec((tm, tn), lambda i, j, k: (i, j)),         # out_r
                pl.BlockSpec((tm, tn), lambda i, j, k: (i, j)),         # out_i
            ),
            scratch_shapes=[pltpu.VMEM((2 * tm, 2 * tn), jnp.float32)],
        ),
        compiler_params=pltpu.CompilerParams(
            dimension_semantics=("parallel", "parallel", "arbitrary"),
        ),
    )(x_stacked, params["w_cat"], params["b_minus"], params["b_plus"])

    return out_r_p[:B, :out_f], out_i_p[:B, :out_f]


if __name__ == "__main__":
    B, IN_F, OUT_F = 8, 32, 32

    key = jax.random.PRNGKey(0)
    k_xr, k_xi, k_wr, k_wi, k_br, k_bi = jax.random.split(key, 6)

    x_r = jax.random.normal(k_xr, (B, IN_F), dtype=jnp.float32)
    x_i = jax.random.normal(k_xi, (B, IN_F), dtype=jnp.float32)

    # PyTorch nn.Linear-style shapes: W (out, in), b (out,)
    bound = 1.0 / (IN_F ** 0.5)
    w_r = jax.random.uniform(k_wr, (OUT_F, IN_F), minval=-bound, maxval=bound,
                             dtype=jnp.float32)
    w_i = jax.random.uniform(k_wi, (OUT_F, IN_F), minval=-bound, maxval=bound,
                             dtype=jnp.float32)
    b_r = jax.random.uniform(k_br, (OUT_F,), minval=-bound, maxval=bound,
                             dtype=jnp.float32)
    b_i = jax.random.uniform(k_bi, (OUT_F,), minval=-bound, maxval=bound,
                             dtype=jnp.float32)

    # One-time prep (what a real module does in __init__), NOT per call.
    params = prepare_complex_linear_params(w_r, w_i, b_r, b_i, use_bf16=False)

    out_r, out_i = complex_linear(params, x_r, x_i)
    jax.block_until_ready((out_r, out_i))

    # Reference (plain JAX, highest matmul precision) against PyTorch semantics.
    hp = jax.lax.Precision.HIGHEST
    ref_r = (jnp.dot(x_r, w_r.T, precision=hp) + b_r) - (jnp.dot(x_i, w_i.T, precision=hp) + b_i)
    ref_i = (jnp.dot(x_i, w_r.T, precision=hp) + b_r) + (jnp.dot(x_r, w_i.T, precision=hp) + b_i)
    # Tolerance allows for backend-default MXU f32 pass count; structural
    # errors (wrong quadrant / missing bias) are O(0.1-1) and would still fail.
    assert jnp.allclose(out_r, ref_r, atol=2e-2, rtol=2e-2)
    assert jnp.allclose(out_i, ref_i, atol=2e-2, rtol=2e-2)

    print("KERNEL_OK")
</pallas_src>

<mosaic_0001>
module attributes {stable_mosaic.version = 11 : i64} {
  func.func @_complex_linear_kernel(%arg0: i32, %arg1: i32, %arg2: i32, %arg3: memref<2x8x128xf32, #tpu.memory_space<vmem>>, %arg4: memref<128x256xf32, #tpu.memory_space<vmem>>, %arg5: memref<1x128xf32, #tpu.memory_space<vmem>>, %arg6: memref<1x128xf32, #tpu.memory_space<vmem>>, %arg7: memref<8x128xf32, #tpu.memory_space<vmem>>, %arg8: memref<8x128xf32, #tpu.memory_space<vmem>>, %arg9: memref<16x256xf32, #tpu.memory_space<vmem>>) attributes {dimension_semantics = [#tpu.dimension_semantics<parallel>, #tpu.dimension_semantics<parallel>, #tpu.dimension_semantics<arbitrary>], iteration_bounds = array<i64: 1, 1, 1>, scalar_prefetch = 0 : i64, scratch_operands = 1 : i64, tpu.core_type = #tpu.core_type<tc>, window_params = [{transform_indices = @transform_0, window_bounds = array<i64: 2, 8, 128>}, {transform_indices = @transform_1, window_bounds = array<i64: 128, 256>}, {transform_indices = @transform_2, window_bounds = array<i64: 1, 128>}, {transform_indices = @transform_3, window_bounds = array<i64: 1, 128>}, {transform_indices = @transform_4, window_bounds = array<i64: 8, 128>}, {transform_indices = @transform_5, window_bounds = array<i64: 8, 128>}]} {
    %c0_i32 = arith.constant 0 : i32
    %0 = arith.cmpi eq, %arg2, %c0_i32 : i32
    %1 = arith.extui %0 : i1 to i32
    %c0_i32_0 = arith.constant 0 : i32
    %2 = arith.cmpi ne, %1, %c0_i32_0 : i32
    scf.if %2 {
      %cst_11 = arith.constant 0.000000e+00 : f32
      %13 = vector.broadcast %cst_11 : f32 to vector<16x256xf32>
      %c0_12 = arith.constant 0 : index
      %c0_13 = arith.constant 0 : index
      %14 = vector.load %arg9[%c0_12, %c0_13] : memref<16x256xf32, #tpu.memory_space<vmem>>, vector<16x256xf32>
      tpu.vector_store %arg9[%c0_12, %c0_13], %13 {strides = array<i32>} : memref<16x256xf32, #tpu.memory_space<vmem>>, vector<16x256xf32>,
    } else {
    }
    %c0 = arith.constant 0 : index
    %c0_1 = arith.constant 0 : index
    %c0_2 = arith.constant 0 : index
    %3 = vector.load %arg3[%c0, %c0_1, %c0_2] : memref<2x8x128xf32, #tpu.memory_space<vmem>>, vector<2x8x128xf32>
    %4 = vector.shape_cast %3 : vector<2x8x128xf32> to vector<16x128xf32>
    %c0_3 = arith.constant 0 : index
    %c0_4 = arith.constant 0 : index
    %5 = vector.load %arg9[%c0_3, %c0_4] : memref<16x256xf32, #tpu.memory_space<vmem>>, vector<16x256xf32>
    %c0_5 = arith.constant 0 : index
    %c0_6 = arith.constant 0 : index
    %6 = vector.load %arg4[%c0_5, %c0_6] : memref<128x256xf32, #tpu.memory_space<vmem>>, vector<128x256xf32>
    %cst = arith.constant dense<0.000000e+00> : vector<16x256xf32>
    %7 = tpu.matmul %4, %6, %cst {dimension_numbers = #tpu.dot_dimension_numbers<[1], [0], [0], [1], [0, 0, 1, 1], [], []>} : vector<16x128xf32>, vector<128x256xf32>, vector<16x256xf32> -> vector<16x256xf32>
    %8 = arith.addf %5, %7 : vector<16x256xf32>
    %c0_7 = arith.constant 0 : index
    %c0_8 = arith.constant 0 : index
    %9 = vector.load %arg9[%c0_7, %c0_8] : memref<16x256xf32, #tpu.memory_space<vmem>>, vector<16x256xf32>
    tpu.vector_store %arg9[%c0_7, %c0_8], %8 {strides = array<i32>} : memref<16x256xf32, #tpu.memory_space<vmem>>, vector<16x256xf32>,
    %c0_i32_9 = arith.constant 0 : i32
    %10 = arith.cmpi eq, %arg2, %c0_i32_9 : i32
    %11 = arith.extui %10 : i1 to i32
    %c0_i32_10 = arith.constant 0 : i32
    %12 = arith.cmpi ne, %11, %c0_i32_10 : i32
    scf.if %12 {
      %c0_11 = arith.constant 0 : index
      %c0_12 = arith.constant 0 : index
      %13 = vector.load %arg9[%c0_11, %c0_12] : memref<16x256xf32, #tpu.memory_space<vmem>>, vector<16x256xf32>
      %14 = vector.extract_strided_slice %13 {offsets = [0, 0], sizes = [8, 128], strides = [1, 1]} : vector<16x256xf32> to vector<8x128xf32>
      %15 = vector.extract_strided_slice %13 {offsets = [0, 128], sizes = [8, 128], strides = [1, 1]} : vector<16x256xf32> to vector<8x128xf32>
      %16 = vector.extract_strided_slice %13 {offsets = [8, 0], sizes = [8, 128], strides = [1, 1]} : vector<16x256xf32> to vector<8x128xf32>
      %17 = vector.extract_strided_slice %13 {offsets = [8, 128], sizes = [8, 128], strides = [1, 1]} : vector<16x256xf32> to vector<8x128xf32>
      %18 = arith.subf %14, %17 : vector<8x128xf32>
      %c0_13 = arith.constant 0 : index
      %c0_14 = arith.constant 0 : index
      %19 = vector.load %arg5[%c0_13, %c0_14] : memref<1x128xf32, #tpu.memory_space<vmem>>, vector<1x128xf32>
      %20 = vector.broadcast %19 : vector<1x128xf32> to vector<8x128xf32>
      %21 = arith.addf %18, %20 : vector<8x128xf32>
      %c0_15 = arith.constant 0 : index
      %c0_16 = arith.constant 0 : index
      %22 = vector.load %arg7[%c0_15, %c0_16] : memref<8x128xf32, #tpu.memory_space<vmem>>, vector<8x128xf32>
      tpu.vector_store %arg7[%c0_15, %c0_16], %21 {strides = array<i32>} : memref<8x128xf32, #tpu.memory_space<vmem>>, vector<8x128xf32>,
      %23 = arith.addf %16, %15 : vector<8x128xf32>
      %c0_17 = arith.constant 0 : index
      %c0_18 = arith.constant 0 : index
      %24 = vector.load %arg6[%c0_17, %c0_18] : memref<1x128xf32, #tpu.memory_space<vmem>>, vector<1x128xf32>
      %25 = vector.broadcast %24 : vector<1x128xf32> to vector<8x128xf32>
      %26 = arith.addf %23, %25 : vector<8x128xf32>
      %c0_19 = arith.constant 0 : index
      %c0_20 = arith.constant 0 : index
      %27 = vector.load %arg8[%c0_19, %c0_20] : memref<8x128xf32, #tpu.memory_space<vmem>>, vector<8x128xf32>
      tpu.vector_store %arg8[%c0_19, %c0_20], %26 {strides = array<i32>} : memref<8x128xf32, #tpu.memory_space<vmem>>, vector<8x128xf32>,
    } else {
    }
    return
  }
  func.func @transform_0(%arg0: i32, %arg1: i32, %arg2: i32) -> (i32, i32, i32) {
    %c0_i32 = arith.constant 0 : i32
    %c0_i32_0 = arith.constant 0 : i32
    return %c0_i32, %arg0, %arg2 : i32, i32, i32
  }
  func.func @transform_1(%arg0: i32, %arg1: i32, %arg2: i32) -> (i32, i32) {
    %c0_i32 = arith.constant 0 : i32
    return %arg2, %arg1 : i32, i32
  }
  func.func @transform_2(%arg0: i32, %arg1: i32, %arg2: i32) -> (i32, i32) {
    %c0_i32 = arith.constant 0 : i32
    %c0_i32_0 = arith.constant 0 : i32
    return %c0_i32, %arg1 : i32, i32
  }
  func.func @transform_3(%arg0: i32, %arg1: i32, %arg2: i32) -> (i32, i32) {
    %c0_i32 = arith.constant 0 : i32
    %c0_i32_0 = arith.constant 0 : i32
    return %c0_i32, %arg1 : i32, i32
  }
  func.func @transform_4(%arg0: i32, %arg1: i32, %arg2: i32) -> (i32, i32) {
    %c0_i32 = arith.constant 0 : i32
    return %arg0, %arg1 : i32, i32
  }
  func.func @transform_5(%arg0: i32, %arg1: i32, %arg2: i32) -> (i32, i32) {
    %c0_i32 = arith.constant 0 : i32
    return %arg0, %arg1 : i32, i32
  }
}

</mosaic_0001>

<llo_original>
// kernel: tpu_custom_call.1
$region0: #{tpu_custom_call.1}
  #allocation0 [shape = 'u32[]', space=smem, size = 0x4, offset = 0x4, fixed_abs, tag = 'smem constant byte address 0x4 - core index']
  #allocation1 [shape = 'u32[144,128]{1,0:T(1,128)}', space=vmem, size = 0x12000, scoped, tag = 'internal scratch']
  #allocation2 [shape = 'f32[16,256]{1,0:T(8,128)}', space=vmem, size = 0x4000, scoped, tag = 'scratch operand']
  %s0 = inlined_call_operand.hbm [shape: f32[2,8,128], index: 0, kind: input, shape index: {}]
  %s1 = inlined_call_operand.hbm [shape: f32[128,256], index: 1, kind: input, shape index: {}]
  %s2 = inlined_call_operand.vmem [shape: f32[1,128], index: 2, kind: input, shape index: {}]
  %s3 = inlined_call_operand.vmem [shape: f32[1,128], index: 3, kind: input, shape index: {}]
  %s4 = inlined_call_operand.hbm [shape: f32[8,128], index: 4, kind: output, shape index: {0}]
  %s5 = inlined_call_operand.hbm [shape: f32[8,128], index: 5, kind: output, shape index: {1}]
  %6 = xla_tuple %s4, %s5
  %s7 = sld [smem:[#allocation0]]
  $region50: #{tpu_custom_call.1} parent=0
    _
  %s9 = ssub.s32 1, %s7
  %s10 = scalar_select 0, %s9, %s7
  $region1: #{tpu_custom_call.1} parent=0
    #allocation3 [shape = 'u8[8192]{0}', space=vmem, size = 0x2000, scoped, tag = 'input window, operand 0, single buffered']
    #allocation4 [shape = 's32[1]{0}', space=sflag, size = 0x4, scoped, tag = 'scoped memory for tpu_custom_call.1']
    #allocation5 [shape = 's32[1]{0}', space=sflag, size = 0x4, scoped, tag = 'scoped memory for tpu_custom_call.1']
    #allocation6 [shape = 'u8[131072]{0}', space=vmem, size = 0x20000, scoped, tag = 'input window, operand 1, single buffered']
    #allocation7 [shape = 's32[1]{0}', space=sflag, size = 0x4, scoped, tag = 'scoped memory for tpu_custom_call.1']
    #allocation8 [shape = 'u8[4096]{0}', space=vmem, size = 0x1000, scoped, tag = 'output window, operand 0, single buffered']
    #allocation9 [shape = 'u8[4096]{0}', space=vmem, size = 0x1000, scoped, tag = 'output window, operand 1, single buffered']
    #allocation10 [shape = 's32[1]{0}', space=sflag, size = 0x4, scoped, tag = 'scoped memory for tpu_custom_call.1']
    %11 = vsyncpa [#allocation4], 0
    %12 = vsyncpa [#allocation7], 0
    %13 = vsyncpa [#allocation5], 0
    %14 = vsyncpa [#allocation10], 0
    // Predicated region
    $region2: #{tpu_custom_call.1} parent=1 // pred_check
      _
    $region3: #{tpu_custom_call.1} parent=1 // pred_check_branch
      %16 = sbr.rel (0) target = $region5
    $region4: #{tpu_custom_call.1} parent=1 // pred_region
      %s18 = ssub.s32 256, 256
      %19 = vsyncadd [#allocation4], %s18
      %s20 = sshll.u32 [#allocation3], 4
      %s21 = int_to_ptr.vmem [resolvable:$true] %s20
      %26 = dma.hbm_to_vmem [thread:$0]  %s0, 256, %s21, [#allocation4], 128, 128, 8
    $region5: #{tpu_custom_call.1} parent=1 // pred_fallthru
      _
    // Predicated region
    $region6: #{tpu_custom_call.1} parent=1 // pred_check
      _
    $region7: #{tpu_custom_call.1} parent=1 // pred_check_branch
      %28 = sbr.rel (0) target = $region9
    $region8: #{tpu_custom_call.1} parent=1 // pred_region
      %s30 = ssub.s32 4096, 4096
      %31 = vsyncadd [#allocation7], %s30
      %s32 = sshll.u32 [#allocation6], 4
      %s33 = int_to_ptr.vmem [resolvable:$true] %s32
      %38 = dma.hbm_to_vmem [thread:$0]  %s1, 4096, %s33, [#allocation7], 256, 256, 16
    $region9: #{tpu_custom_call.1} parent=1 // pred_fallthru
      _
    // Predicated region
    $region10: #{tpu_custom_call.1} parent=1 // pred_check
      _
    $region11: #{tpu_custom_call.1} parent=1 // pred_check_branch
      %40 = sbr.rel (0) target = $region13
    $region12: #{tpu_custom_call.1} parent=1 // pred_region
      _
    $region13: #{tpu_custom_call.1} parent=1 // pred_fallthru
      _
    // Predicated region
    $region14: #{tpu_custom_call.1} parent=1 // pred_check
      _
    $region15: #{tpu_custom_call.1} parent=1 // pred_check_branch
      %42 = sbr.rel (0) target = $region17
    $region16: #{tpu_custom_call.1} parent=1 // pred_region
      _
    $region17: #{tpu_custom_call.1} parent=1 // pred_fallthru
      _
    // Predicated region
    $region18: #{tpu_custom_call.1} parent=1 // pred_check
      _
    $region19: #{tpu_custom_call.1} parent=1 // pred_check_branch
      %44 = sbr.rel (0) target = $region21
    $region20: #{tpu_custom_call.1} parent=1 // pred_region
      %45 = dma.done [#allocation4], 256
    $region21: #{tpu_custom_call.1} parent=1 // pred_fallthru
      _
    // Predicated region
    $region22: #{tpu_custom_call.1} parent=1 // pred_check
      _
    $region23: #{tpu_custom_call.1} parent=1 // pred_check_branch
      %47 = sbr.rel (0) target = $region25
    $region24: #{tpu_custom_call.1} parent=1 // pred_region
      %48 = dma.done [#allocation7], 4096
    $region25: #{tpu_custom_call.1} parent=1 // pred_fallthru
      _
    %p49 = scmp.eq.s32.totalorder 0, 0
    // Predicated region
    $region26: #{tpu_custom_call.1} parent=1 // pred_check
      %p50 = pneg %p49
    $region27: #{tpu_custom_call.1} parent=1 // pred_check_branch
      %52 = sbr.rel (%p50) target = $region29
    $region28: #{tpu_custom_call.1} parent=1 // pred_region
      %53 = vst [vmem:[#allocation2] sm:$0xff] 0.0
      %54 = vst [vmem:[#allocation2 + $0x8] sm:$0xff] 0.0
      %55 = vst [vmem:[#allocation2 + $0x10] sm:$0xff] 0.0
      %56 = vst [vmem:[#allocation2 + $0x18] sm:$0xff] 0.0
    $region29: #{tpu_custom_call.1} parent=1 // pred_fallthru
      _
    %v57 = vld [vmem:[#allocation3] sm:$0xff]
    %v58 = vld [vmem:[#allocation3 + $0x8] sm:$0xff]
    %v59 = vld [vmem:[#allocation2] sm:$0xff]
    %v60 = vld [vmem:[#allocation2 + $0x8] sm:$0xff]
    %v61 = vld [vmem:[#allocation2 + $0x10] sm:$0xff]
    %v62 = vld [vmem:[#allocation2 + $0x18] sm:$0xff]
    %v63 = vld [vmem:[#allocation6] sm:$0xff]
    %v64 = vld [vmem:[#allocation6 + $0x8] sm:$0xff]
    %v65 = vld [vmem:[#allocation6 + $0x10] sm:$0xff]
    %v66 = vld [vmem:[#allocation6 + $0x18] sm:$0xff]
    %v67 = vld [vmem:[#allocation6 + $0x20] sm:$0xff]
    %v68 = vld [vmem:[#allocation6 + $0x28] sm:$0xff]
    %v69 = vld [vmem:[#allocation6 + $0x30] sm:$0xff]
    %v70 = vld [vmem:[#allocation6 + $0x38] sm:$0xff]
    %v71 = vld [vmem:[#allocation6 + $0x40] sm:$0xff]
    %v72 = vld [vmem:[#allocation6 + $0x48] sm:$0xff]
    %v73 = vld [vmem:[#allocation6 + $0x50] sm:$0xff]
    %v74 = vld [vmem:[#allocation6 + $0x58] sm:$0xff]
    %v75 = vld [vmem:[#allocation6 + $0x60] sm:$0xff]
    %v76 = vld [vmem:[#allocation6 + $0x68] sm:$0xff]
    %v77 = vld [vmem:[#allocation6 + $0x70] sm:$0xff]
    %v78 = vld [vmem:[#allocation6 + $0x78] sm:$0xff]
    %v79 = vld [vmem:[#allocation6 + $0x80] sm:$0xff]
    %v80 = vld [vmem:[#allocation6 + $0x88] sm:$0xff]
    %v81 = vld [vmem:[#allocation6 + $0x90] sm:$0xff]
    %v82 = vld [vmem:[#allocation6 + $0x98] sm:$0xff]
    %v83 = vld [vmem:[#allocation6 + $0xa0] sm:$0xff]
    %v84 = vld [vmem:[#allocation6 + $0xa8] sm:$0xff]
    %v85 = vld [vmem:[#allocation6 + $0xb0] sm:$0xff]
    %v86 = vld [vmem:[#allocation6 + $0xb8] sm:$0xff]
    %v87 = vld [vmem:[#allocation6 + $0xc0] sm:$0xff]
    %v88 = vld [vmem:[#allocation6 + $0xc8] sm:$0xff]
    %v89 = vld [vmem:[#allocation6 + $0xd0] sm:$0xff]
    %v90 = vld [vmem:[#allocation6 + $0xd8] sm:$0xff]
    %v91 = vld [vmem:[#allocation6 + $0xe0] sm:$0xff]
    %v92 = vld [vmem:[#allocation6 + $0xe8] sm:$0xff]
    %v93 = vld [vmem:[#allocation6 + $0xf0] sm:$0xff]
    %v94 = vld [vmem:[#allocation6 + $0xf8] sm:$0xff]
    %95 = vmatprep.subr.mxu0 %v94
    %96 = vmatpush1.msra.mxu0 %v93
    %97 = vmatprep.subr.mxu0 %v92
    %98 = vmatpush1.msra.mxu0 %v91
    %99 = vmatprep.subr.mxu0 %v90
    %100 = vmatpush1.msra.mxu0 %v89
    %101 = vmatprep.subr.mxu0 %v88
    %102 = vmatpush1.msra.mxu0 %v87
    %103 = vmatprep.subr.mxu0 %v86
    %104 = vmatpush1.msra.mxu0 %v85
    %105 = vmatprep.subr.mxu0 %v84
    %106 = vmatpush1.msra.mxu0 %v83
    %107 = vmatprep.subr.mxu0 %v82
    %108 = vmatpush1.msra.mxu0 %v81
    %109 = vmatprep.subr.mxu0 %v80
    %110 = vmatpush1.msra.mxu0 %v79
    %111 = vmatprep.subr.mxu0 %v78
    %112 = vmatpush1.msra.mxu0 %v77
    %113 = vmatprep.subr.mxu0 %v76
    %114 = vmatpush1.msra.mxu0 %v75
    %115 = vmatprep.subr.mxu0 %v74
    %116 = vmatpush1.msra.mxu0 %v73
    %117 = vmatprep.subr.mxu0 %v72
    %118 = vmatpush1.msra.mxu0 %v71
    %119 = vmatprep.subr.mxu0 %v70
    %120 = vmatpush1.msra.mxu0 %v69
    %121 = vmatprep.subr.mxu0 %v68
    %122 = vmatpush1.msra.mxu0 %v67
    %123 = vmatprep.subr.mxu0 %v66
    %124 = vmatpush1.msra.mxu0 %v65
    %125 = vmatprep.subr.mxu0 %v64
    %126 = vmatpush1.msra.mxu0 %v63
    %127 = vmatprep.subr.mxu0 0.0
    %128 = vmatpush2.msra.mxu0 0.0
    %129 = vmatprep.subr.mxu0 0.0
    %130 = vmatpush2.msra.mxu0 0.0
    %131 = vmatprep.subr.mxu0 0.0
    %132 = vmatpush2.msra.mxu0 0.0
    %133 = vmatprep.subr.mxu0 0.0
    %134 = vmatpush2.msra.mxu0 0.0
    %135 = vmatprep.subr.mxu0 0.0
    %136 = vmatpush2.msra.mxu0 0.0
    %137 = vmatprep.subr.mxu0 0.0
    %138 = vmatpush2.msra.mxu0 0.0
    %139 = vmatprep.subr.mxu0 0.0
    %140 = vmatpush2.msra.mxu0 0.0
    %141 = vmatprep.subr.mxu0 0.0
    %142 = vmatpush2.msra.mxu0 0.0
    %143 = vmatprep.subr.mxu0 0.0
    %144 = vmatpush2.msra.mxu0 0.0
    %145 = vmatprep.subr.mxu0 0.0
    %146 = vmatpush2.msra.mxu0 0.0
    %147 = vmatprep.subr.mxu0 0.0
    %148 = vmatpush2.msra.mxu0 0.0
    %149 = vmatprep.subr.mxu0 0.0
    %150 = vmatpush2.msra.mxu0 0.0
    %151 = vmatprep.subr.mxu0 0.0
    %152 = vmatpush2.msra.mxu0 0.0
    %153 = vmatprep.subr.mxu0 0.0
    %154 = vmatpush2.msra.mxu0 0.0
    %155 = vmatprep.subr.mxu0 0.0
    %156 = vmatpush2.msra.mxu0 0.0
    %157 = vmatprep.subr.mxu0 0.0
    %158 = vmatpush2.msra.mxu0 0.0
    %159 = vmatprep.mubr.f32.mxu0 0.0
    %160 = vmatmul.mubr.f32.gmra.mxu0 %v57
    %v161 = vpop.f32.mrf.mxu0
    %v162 = vadd.f32 0.0, %v161
    %v163 = vpop.f32.mrf.mxu0
    %v164 = vadd.f32 0.0, %v163
    %165 = vmatprep.mubr.f32.mxu0 0.0
    %166 = vmatmul.mubr.f32.gmra.mxu0 %v58
    %v167 = vpop.f32.mrf.mxu0
    %v168 = vadd.f32 0.0, %v167
    %v169 = vpop.f32.mrf.mxu0
    %v170 = vadd.f32 0.0, %v169
    %171 = vdwg.mxu0
    %v172 = vadd.f32 %v59, %v162
    %v173 = vadd.f32 %v60, %v164
    %v174 = vadd.f32 %v61, %v168
    %v175 = vadd.f32 %v62, %v170
    %176 = vst [vmem:[#allocation2] sm:$0xff] %v172
    %177 = vst [vmem:[#allocation2 + $0x8] sm:$0xff] %v173
    %178 = vst [vmem:[#allocation2 + $0x10] sm:$0xff] %v174
    %179 = vst [vmem:[#allocation2 + $0x18] sm:$0xff] %v175
    // Predicated region
    $region30: #{tpu_custom_call.1} parent=1 // pred_check
      %p180 = pneg %p49
    $region31: #{tpu_custom_call.1} parent=1 // pred_check_branch
      %182 = sbr.rel (%p180) target = $region33
    $region32: #{tpu_custom_call.1} parent=1 // pred_region
      %v183 = vld [vmem:[#allocation2] sm:$0xff]
      %v184 = vld [vmem:[#allocation2 + $0x8] sm:$0xff]
      %v185 = vld [vmem:[#allocation2 + $0x10] sm:$0xff]
      %v186 = vld [vmem:[#allocation2 + $0x18] sm:$0xff]
      %v187 = vsub.f32 %v183, %v186
      %v188 = vld [vmem:[%s2] sm:$0x1]
      %v190 = vlaneseq
      %v191 = vshrl.u32 %v190, 7
      %v192 = vsub.s32 0, %v191
      %v193 = vrot.slane %v188, %v192
      %v195 = vadd.f32 %v187, %v193
      %196 = vst [vmem:[#allocation8] sm:$0xff] %v195
      %v197 = vadd.f32 %v185, %v184
      %v198 = vld [vmem:[%s3] sm:$0x1]
      %v200 = vlaneseq
      %v201 = vshrl.u32 %v200, 7
      %v202 = vsub.s32 0, %v201
      %v203 = vrot.slane %v198, %v202
      %v205 = vadd.f32 %v197, %v203
      %206 = vst [vmem:[#allocation9] sm:$0xff] %v205
    $region33: #{tpu_custom_call.1} parent=1 // pred_fallthru
      _
    // Predicated region
    $region34: #{tpu_custom_call.1} parent=1 // pred_check
      _
    $region35: #{tpu_custom_call.1} parent=1 // pred_check_branch
      %208 = sbr.rel (0) target = $region37
    $region36: #{tpu_custom_call.1} parent=1 // pred_region
      %s210 = ssub.s32 128, 128
      %211 = vsyncadd [#allocation5], %s210
      %s213 = sshll.u32 [#allocation8], 4
      %s214 = int_to_ptr.vmem [resolvable:$true] %s213
      %216 = dma.vmem_to_hbm [thread:$0]  %s214, 128, %s4, [#allocation5]
    $region37: #{tpu_custom_call.1} parent=1 // pred_fallthru
      _
    // Predicated region
    $region38: #{tpu_custom_call.1} parent=1 // pred_check
      _
    $region39: #{tpu_custom_call.1} parent=1 // pred_check_branch
      %218 = sbr.rel (0) target = $region41
    $region40: #{tpu_custom_call.1} parent=1 // pred_region
      %s220 = ssub.s32 128, 128
      %221 = vsyncadd [#allocation10], %s220
      %s223 = sshll.u32 [#allocation9], 4
      %s224 = int_to_ptr.vmem [resolvable:$true] %s223
      %226 = dma.vmem_to_hbm [thread:$0]  %s224, 128, %s5, [#allocation10]
    $region41: #{tpu_custom_call.1} parent=1 // pred_fallthru
      _
    // Predicated region
    $region42: #{tpu_custom_call.1} parent=1 // pred_check
      _
    $region43: #{tpu_custom_call.1} parent=1 // pred_check_branch
      %228 = sbr.rel (0) target = $region45
    $region44: #{tpu_custom_call.1} parent=1 // pred_region
      %229 = dma.done [#allocation5], 128
    $region45: #{tpu_custom_call.1} parent=1 // pred_fallthru
      _
    // Predicated region
    $region46: #{tpu_custom_call.1} parent=1 // pred_check
      _
    $region47: #{tpu_custom_call.1} parent=1 // pred_check_branch
      %231 = sbr.rel (0) target = $region49
    $region48: #{tpu_custom_call.1} parent=1 // pred_region
      %232 = dma.done [#allocation10], 128
    $region49: #{tpu_custom_call.1} parent=1 // pred_fallthru
      _
    %233 = vsyncpa [#allocation4], 1
    %234 = vsyncpa [#allocation7], 1
    %235 = vsyncpa [#allocation5], 1
    %236 = vsyncpa [#allocation10], 1

</llo_original>
